<compile_context>
chip_gen: v7x
topology: tpu7x:2x2x1
jax: 0.10.0
libtpu: 0.0.40
codegen_flags: <defaults>
</compile_context>

<pallas_src>
import numpy as np
import jax
import jax.numpy as jnp
from jax.experimental import pallas as pl
from jax.experimental.pallas import tpu as pltpu


# Keep each x/out tile <= ~2 MiB: with double-buffered x, out and pe blocks the
# worst-case VMEM footprint is ~12 MiB, which fits every generation's default
# scoped-VMEM limit (v5e 16 MiB is the tightest).
_MAX_XTILE_BYTES = 2 * 1024 * 1024


def make_sinusoid_table(n_position: int, d_hid: int) -> jnp.ndarray:
    """Deterministic sinusoid position encoding table, float32, (n_position, d_hid)."""
    pos = np.arange(n_position, dtype=np.float64)[:, None]           # (P, 1)
    hid = np.arange(d_hid, dtype=np.int64)[None, :]                  # (1, D)
    angle_rates = np.power(10000.0, 2.0 * (hid // 2) / float(d_hid))  # (1, D)
    table = pos / angle_rates                                         # (P, D)
    table[:, 0::2] = np.sin(table[:, 0::2])
    table[:, 1::2] = np.cos(table[:, 1::2])
    return jnp.asarray(table, dtype=jnp.float32)


def _add_pe_kernel(x_ref, pe_ref, o_ref):
    # x block: (TB, TR, C); pe block: (TR, C) — broadcast over the batch dim.
    o_ref[...] = x_ref[...] + pe_ref[...]


def _largest_divisor_multiple(n: int, multiple: int, max_size: int) -> int:
    """Largest divisor of n that is a multiple of `multiple` and <= max_size.
    Falls back to n itself (full-extent block is always legal) if none exists."""
    best = None
    upper = min(n, max_size)
    for t in range(multiple, upper + 1, multiple):
        if n % t == 0:
            best = t
    return n if best is None else best


def _largest_divisor(n: int, max_size: int) -> int:
    best = 1
    for t in range(1, min(n, max_size) + 1):
        if n % t == 0:
            best = t
    return best


def _pe_add_3d(x3: jnp.ndarray, pe2: jnp.ndarray) -> jnp.ndarray:
    """x3: (B, R, C); pe2: (R, C).  Returns x3 + pe2[None]."""
    B, R, C = x3.shape
    itemsize = x3.dtype.itemsize

    rows_budget = max(1, _MAX_XTILE_BYTES // max(1, C * itemsize))
    TR = _largest_divisor_multiple(R, 8, rows_budget)      # multiple of 8 or full R
    TB = _largest_divisor(B, max(1, rows_budget // TR))    # fuse batch rows into tile

    # Row axis outer, batch axis inner: the pe block index does not change
    # across the inner (batch) axis, so its VMEM tile is reused without re-DMA.
    grid = (R // TR, B // TB)

    return pl.pallas_call(
        _add_pe_kernel,
        out_shape=jax.ShapeDtypeStruct((B, R, C), x3.dtype),
        grid_spec=pltpu.PrefetchScalarGridSpec(
            num_scalar_prefetch=0,
            grid=grid,
            in_specs=[
                pl.BlockSpec((TB, TR, C), lambda r, b: (b, r, 0)),  # x tile
                pl.BlockSpec((TR, C), lambda r, b: (r, 0)),         # pos-table tile
            ],
            out_specs=pl.BlockSpec((TB, TR, C), lambda r, b: (b, r, 0)),
        ),
        compiler_params=pltpu.CompilerParams(
            # Independent axes; lets v7x shard across both TensorCores even
            # when B == 1 (via the row axis).
            dimension_semantics=("parallel", "parallel"),
        ),
    )(x3, pe2)


def positional_encoding(x: jnp.ndarray, pos_table: jnp.ndarray) -> jnp.ndarray:
    """x: (B, S, D); pos_table: (n_position, D).  Returns x + pos_table[:S]."""
    B, S, D = x.shape
    pe = pos_table[:S, :].astype(x.dtype)  # (S, D) — static slice, plain-JAX glue

    # Lane-dense view: flatten the (S, D) plane so the last dim presented to the
    # kernel is a multiple of 128 (pure layout plumbing; the row-major reshape
    # preserves the elementwise x[b,s,d] + pe[s,d] correspondence because pe has
    # no batch dimension).
    if (S * D) % 128 == 0:
        C = 128
        for cand in (1024, 512, 256, 128):
            if (S * D) % cand == 0:
                C = cand
                break
        R = (S * D) // C
        out = _pe_add_3d(x.reshape(B, R, C), pe.reshape(R, C))
        return out.reshape(B, S, D)

    # Fallback: present D as the lane dim (lane-sparse if D % 128 != 0).
    # TODO(synk): pad D to a multiple of 128 for lane-dense stores when S*D is
    # not 128-divisible; not needed for the shapes exercised here.
    return _pe_add_3d(x, pe)


if __name__ == "__main__":
    d_hid = 32
    n_position = 200
    B, S = 2, 8

    # Deterministic parameter (buffer) setup — no checkpoint load.
    pos_table = make_sinusoid_table(n_position, d_hid)

    key = jax.random.PRNGKey(0)
    x = jax.random.normal(key, (B, S, d_hid), dtype=jnp.float32)

    out = positional_encoding(x, pos_table)
    out = jax.block_until_ready(out)

    # Correctness check against plain-JAX reference.
    ref = x + pos_table[None, :S, :]
    np.testing.assert_allclose(np.asarray(out), np.asarray(ref), rtol=1e-6, atol=1e-6)

    print("KERNEL_OK")
</pallas_src>

<mosaic_0001>
module attributes {stable_mosaic.version = 11 : i64} {
  func.func @_add_pe_kernel(%arg0: i32, %arg1: i32, %arg2: memref<2x1x256xf32, #tpu.memory_space<vmem>>, %arg3: memref<1x256xf32, #tpu.memory_space<vmem>>, %arg4: memref<2x1x256xf32, #tpu.memory_space<vmem>>) attributes {dimension_semantics = [#tpu.dimension_semantics<parallel>, #tpu.dimension_semantics<parallel>], iteration_bounds = array<i64: 1, 1>, scalar_prefetch = 0 : i64, scratch_operands = 0 : i64, tpu.core_type = #tpu.core_type<tc>, window_params = [{transform_indices = @transform_0, window_bounds = array<i64: 2, 1, 256>}, {transform_indices = @transform_1, window_bounds = array<i64: 1, 256>}, {transform_indices = @transform_2, window_bounds = array<i64: 2, 1, 256>}]} {
    %c0 = arith.constant 0 : index
    %c0_0 = arith.constant 0 : index
    %c0_1 = arith.constant 0 : index
    %0 = vector.load %arg2[%c0, %c0_0, %c0_1] : memref<2x1x256xf32, #tpu.memory_space<vmem>>, vector<2x1x256xf32>
    %c0_2 = arith.constant 0 : index
    %c0_3 = arith.constant 0 : index
    %1 = vector.load %arg3[%c0_2, %c0_3] : memref<1x256xf32, #tpu.memory_space<vmem>>, vector<1x256xf32>
    %2 = vector.shape_cast %1 : vector<1x256xf32> to vector<1x1x256xf32>
    %3 = vector.broadcast %2 : vector<1x1x256xf32> to vector<2x1x256xf32>
    %4 = arith.addf %0, %3 : vector<2x1x256xf32>
    %c0_4 = arith.constant 0 : index
    %c0_5 = arith.constant 0 : index
    %c0_6 = arith.constant 0 : index
    %5 = vector.load %arg4[%c0_4, %c0_5, %c0_6] : memref<2x1x256xf32, #tpu.memory_space<vmem>>, vector<2x1x256xf32>
    tpu.vector_store %arg4[%c0_4, %c0_5, %c0_6], %4 {strides = array<i32>} : memref<2x1x256xf32, #tpu.memory_space<vmem>>, vector<2x1x256xf32>,
    return
  }
  func.func @transform_0(%arg0: i32, %arg1: i32) -> (i32, i32, i32) {
    %c0_i32 = arith.constant 0 : i32
    %c0_i32_0 = arith.constant 0 : i32
    return %arg1, %arg0, %c0_i32 : i32, i32, i32
  }
  func.func @transform_1(%arg0: i32, %arg1: i32) -> (i32, i32) {
    %c0_i32 = arith.constant 0 : i32
    %c0_i32_0 = arith.constant 0 : i32
    return %arg0, %c0_i32 : i32, i32
  }
  func.func @transform_2(%arg0: i32, %arg1: i32) -> (i32, i32, i32) {
    %c0_i32 = arith.constant 0 : i32
    %c0_i32_0 = arith.constant 0 : i32
    return %arg1, %arg0, %c0_i32 : i32, i32, i32
  }
}

</mosaic_0001>

<llo_original>
// kernel: tpu_custom_call.1
$region0: #{tpu_custom_call.1}
  #allocation0 [shape = 'u32[]', space=smem, size = 0x4, offset = 0x4, fixed_abs, tag = 'smem constant byte address 0x4 - core index']
  #allocation1 [shape = 'u32[144,128]{1,0:T(1,128)}', space=vmem, size = 0x12000, scoped, tag = 'internal scratch']
  %s0 = inlined_call_operand.hbm [shape: f32[2,1,256], index: 0, kind: input, shape index: {}]
  %s1 = inlined_call_operand.vmem [shape: f32[1,256], index: 1, kind: input, shape index: {}]
  %s2 = inlined_call_operand.hbm [shape: f32[2,1,256], index: 2, kind: output, shape index: {}]
  %s3 = sld [smem:[#allocation0]]
  $region22: #{tpu_custom_call.1} parent=0
    _
  %s5 = ssub.s32 1, %s3
  %s6 = scalar_select 0, %s5, %s3
  $region1: #{tpu_custom_call.1} parent=0
    #allocation2 [shape = 'u8[2048]{0}', space=vmem, size = 0x800, scoped, tag = 'input window, operand 0, single buffered']
    #allocation3 [shape = 's32[1]{0}', space=sflag, size = 0x4, scoped, tag = 'scoped memory for tpu_custom_call.1']
    #allocation4 [shape = 's32[1]{0}', space=sflag, size = 0x4, scoped, tag = 'scoped memory for tpu_custom_call.1']
    #allocation5 [shape = 'u8[2048]{0}', space=vmem, size = 0x800, scoped, tag = 'output window, operand 0, single buffered']
    %7 = vsyncpa [#allocation3], 0
    %8 = vsyncpa [#allocation4], 0
    // Predicated region
    $region2: #{tpu_custom_call.1} parent=1 // pred_check
      _
    $region3: #{tpu_custom_call.1} parent=1 // pred_check_branch
      %10 = sbr.rel (0) target = $region5
    $region4: #{tpu_custom_call.1} parent=1 // pred_region
      %s12 = ssub.s32 64, 64
      %13 = vsyncadd [#allocation3], %s12
      %s14 = sshll.u32 [#allocation2], 4
      %s15 = int_to_ptr.vmem [resolvable:$true] %s14
      %20 = dma.hbm_to_vmem [thread:$0]  %s0, 64, %s15, [#allocation3], 32, 32, 2
    $region5: #{tpu_custom_call.1} parent=1 // pred_fallthru
      _
    // Predicated region
    $region6: #{tpu_custom_call.1} parent=1 // pred_check
      _
    $region7: #{tpu_custom_call.1} parent=1 // pred_check_branch
      %22 = sbr.rel (0) target = $region9
    $region8: #{tpu_custom_call.1} parent=1 // pred_region
      _
    $region9: #{tpu_custom_call.1} parent=1 // pred_fallthru
      _
    // Predicated region
    $region10: #{tpu_custom_call.1} parent=1 // pred_check
      _
    $region11: #{tpu_custom_call.1} parent=1 // pred_check_branch
      %24 = sbr.rel (0) target = $region13
    $region12: #{tpu_custom_call.1} parent=1 // pred_region
      %25 = dma.done [#allocation3], 64
    $region13: #{tpu_custom_call.1} parent=1 // pred_fallthru
      _
    %v26 = vld [vmem:[#allocation2] sm:$0x3]
    %v27 = vld [vmem:[#allocation2 + $0x2] sm:$0x3]
    %v28 = vld [vmem:[%s1] sm:$0x3]
    %v29 = vadd.f32 %v26, %v28
    %v30 = vadd.f32 %v27, %v28
    %v31 = vlaneseq
    %vm32 = vcmp.ge.s32.totalorder %v31, 0
    %vm33 = vcmp.lt.s32.totalorder %v31, 256
    %vm34 = vmand %vm32, %vm33
    %35 = vst.msk [vmem:[#allocation5] sm:$0x3] %vm34, %v29
    %36 = vst.msk [vmem:[#allocation5 + $0x2] sm:$0x3] %vm34, %v30
    // Predicated region
    $region14: #{tpu_custom_call.1} parent=1 // pred_check
      _
    $region15: #{tpu_custom_call.1} parent=1 // pred_check_branch
      %38 = sbr.rel (0) target = $region17
    $region16: #{tpu_custom_call.1} parent=1 // pred_region
      %s40 = ssub.s32 64, 64
      %41 = vsyncadd [#allocation4], %s40
      %s42 = sshll.u32 [#allocation5], 4
      %s43 = int_to_ptr.vmem [resolvable:$true] %s42
      %48 = dma.vmem_to_hbm [thread:$0]  %s43, 64, %s2, [#allocation4], 32, 32, 2
    $region17: #{tpu_custom_call.1} parent=1 // pred_fallthru
      _
    // Predicated region
    $region18: #{tpu_custom_call.1} parent=1 // pred_check
      _
    $region19: #{tpu_custom_call.1} parent=1 // pred_check_branch
      %50 = sbr.rel (0) target = $region21
    $region20: #{tpu_custom_call.1} parent=1 // pred_region
      %51 = dma.done [#allocation4], 64
    $region21: #{tpu_custom_call.1} parent=1 // pred_fallthru
      _
    %52 = vsyncpa [#allocation3], 1
    %53 = vsyncpa [#allocation4], 1

</llo_original>
